<compile_context>
chip_gen: v7x
topology: tpu7x:2x2x1
jax: 0.10.0
libtpu: 0.0.40
codegen_flags: <defaults>
</compile_context>

<pallas_src>
import functools

import jax
import jax.numpy as jnp
from jax import lax
from jax.experimental import pallas as pl
from jax.experimental.pallas import tpu as pltpu


def _conv3x3_kernel(x_ref, w_ref, mask_ref, o_ref, *, H, W):
    # x_ref:    (1, C, H*W)      one batch element, channels as sublane rows
    # w_ref:    (C_out, 9*C)     bf16 packed conv weights, column order (kh, kw, ci)
    # mask_ref: (9, H*W)         f32 {0,1} "same"-padding validity mask per tap
    # o_ref:    (1, C_out, H*W)  f32 conv output (pre pixel-unshuffle)
    HW = H * W
    x = x_ref[0]                                        # (C, HW) f32

    planes = []
    tap = 0
    for dh in (-1, 0, 1):
        for dw in (-1, 0, 1):
            d = dh * W + dw                             # flattened lane offset
            if d == 0:
                rolled = x
            else:
                # rolled[p] = x[(p + d) mod HW]; wrapped/row-crossing lanes are
                # zeroed by the mask below, so this equals zero-padded shifting.
                rolled = pltpu.roll(x, shift=(-d) % HW, axis=1)
            m = mask_ref[tap:tap + 1, :]                # (1, HW), broadcasts over C
            planes.append(rolled * m)
            tap += 1

    # im2col: (9*C, HW), bf16 for the MXU; accumulate in f32.
    im2col = jnp.concatenate(planes, axis=0).astype(jnp.bfloat16)
    out = jnp.dot(w_ref[...], im2col, preferred_element_type=jnp.float32)
    o_ref[0] = out.astype(o_ref.dtype)                  # (C_out, HW), lane-dense store


def downsample_pallas(x, w):
    """x: (B, C, H, W) float32 (NCHW, like PyTorch); w: (C//2, C, 3, 3) conv weight.
    Returns (B, 2*C, H//2, W//2) = PixelUnshuffle(2)(Conv3x3(x))."""
    B, C, H, W = x.shape
    C_out = w.shape[0]
    HW = H * W
    assert H % 2 == 0 and W % 2 == 0 and w.shape[1] == C

    # ---- weight repack (hoisted): (C_out, C, 3, 3) -> (C_out, 9*C), col = (kh, kw, ci)
    w_mat = jnp.transpose(w, (0, 2, 3, 1)).reshape(C_out, 9 * C).astype(jnp.bfloat16)

    # ---- per-tap boundary masks over the flattened lane index p = h*W + w (hoisted)
    p = jnp.arange(HW, dtype=jnp.int32)
    h_idx, w_idx = p // W, p % W
    masks = []
    for dh in (-1, 0, 1):
        for dw in (-1, 0, 1):
            ok = ((h_idx + dh >= 0) & (h_idx + dh < H) &
                  (w_idx + dw >= 0) & (w_idx + dw < W))
            masks.append(ok)
    mask = jnp.stack(masks, axis=0).astype(jnp.float32)           # (9, HW)

    x_flat = x.reshape(B, C, HW)                                   # free reshape, no transpose

    conv_flat = pl.pallas_call(
        functools.partial(_conv3x3_kernel, H=H, W=W),
        out_shape=jax.ShapeDtypeStruct((B, C_out, HW), jnp.float32),
        grid_spec=pltpu.PrefetchScalarGridSpec(
            num_scalar_prefetch=0,
            grid=(B,),
            in_specs=[
                pl.BlockSpec((1, C, HW), lambda b: (b, 0, 0)),     # lane dim = H*W (128-mult)
                pl.BlockSpec((C_out, 9 * C), lambda b: (0, 0)),
                pl.BlockSpec((9, HW), lambda b: (0, 0)),
            ],
            out_specs=pl.BlockSpec((1, C_out, HW), lambda b: (b, 0, 0)),
        ),
        compiler_params=pltpu.CompilerParams(
            dimension_semantics=("parallel",),
            vmem_limit_bytes=32 * 1024 * 1024),
    )(x_flat, w_mat, mask)

    # ---- PixelUnshuffle(2): pure index permutation on the half-sized conv output.
    # out[b, c*4 + i*2 + j, h2, w2] = conv[b, c, 2*h2 + i, 2*w2 + j]
    conv = conv_flat.reshape(B, C_out, H, W)
    out = (conv.reshape(B, C_out, H // 2, 2, W // 2, 2)
               .transpose(0, 1, 3, 5, 2, 4)
               .reshape(B, C_out * 4, H // 2, W // 2))
    return out


def downsample_ref(x, w):
    """Pure-JAX reference: 3x3 conv (pad 1, no bias) + PixelUnshuffle(2)."""
    conv = lax.conv_general_dilated(
        x, w, window_strides=(1, 1), padding=((1, 1), (1, 1)),
        dimension_numbers=('NCHW', 'OIHW', 'NCHW'))
    B, Co, H, W = conv.shape
    return (conv.reshape(B, Co, H // 2, 2, W // 2, 2)
                .transpose(0, 1, 3, 5, 2, 4)
                .reshape(B, Co * 4, H // 2, W // 2))


if __name__ == "__main__":
    key = jax.random.PRNGKey(0)
    kx, kw = jax.random.split(key)

    B, n_feat, H, W = 2, 8, 16, 16
    x = jax.random.normal(kx, (B, n_feat, H, W), jnp.float32)      # NCHW like PyTorch
    w = jax.random.normal(kw, (n_feat // 2, n_feat, 3, 3), jnp.float32) * 0.1

    out = jax.block_until_ready(downsample_pallas(x, w))
    ref = jax.block_until_ready(downsample_ref(x, w))

    assert out.shape == (B, 2 * n_feat, H // 2, W // 2), out.shape
    err = float(jnp.max(jnp.abs(out - ref)))
    # bf16 MXU operands with f32 accumulation -> tolerance loosened vs f32-only.
    assert err < 5e-2, f"mismatch vs JAX reference: max abs err = {err}"

    print("KERNEL_OK")
</pallas_src>

<mosaic_0001>
module attributes {stable_mosaic.version = 11 : i64} {
  func.func @_conv3x3_kernel(%arg0: i32, %arg1: memref<1x8x256xf32, #tpu.memory_space<vmem>>, %arg2: memref<4x72xbf16, #tpu.memory_space<vmem>>, %arg3: memref<9x256xf32, #tpu.memory_space<vmem>>, %arg4: memref<1x4x256xf32, #tpu.memory_space<vmem>>) attributes {dimension_semantics = [#tpu.dimension_semantics<parallel>], iteration_bounds = array<i64: 2>, scalar_prefetch = 0 : i64, scratch_operands = 0 : i64, tpu.core_type = #tpu.core_type<tc>, window_params = [{transform_indices = @transform_0, window_bounds = array<i64: 1, 8, 256>}, {pipeline_mode = #tpu.pipeline_mode<synchronous>, transform_indices = @transform_1, window_bounds = array<i64: 4, 72>}, {pipeline_mode = #tpu.pipeline_mode<synchronous>, transform_indices = @transform_2, window_bounds = array<i64: 9, 256>}, {transform_indices = @transform_3, window_bounds = array<i64: 1, 4, 256>}]} {
    %c0 = arith.constant 0 : index
    %c0_0 = arith.constant 0 : index
    %c0_1 = arith.constant 0 : index
    %0 = vector.load %arg1[%c0, %c0_0, %c0_1] : memref<1x8x256xf32, #tpu.memory_space<vmem>>, vector<1x8x256xf32>
    %1 = vector.shape_cast %0 : vector<1x8x256xf32> to vector<8x256xf32>
    %c17_i32 = arith.constant 17 : i32
    %2 = tpu.dynamic_rotate %1 by %c17_i32 dim 1 : vector<8x256xf32>, i32 -> vector<8x256xf32>
    %c0_2 = arith.constant 0 : index
    %c0_3 = arith.constant 0 : index
    %3 = vector.load %arg3[%c0_2, %c0_3] : memref<9x256xf32, #tpu.memory_space<vmem>>, vector<1x256xf32>
    %4 = vector.broadcast %3 : vector<1x256xf32> to vector<8x256xf32>
    %5 = arith.mulf %2, %4 : vector<8x256xf32>
    %c16_i32 = arith.constant 16 : i32
    %6 = tpu.dynamic_rotate %1 by %c16_i32 dim 1 : vector<8x256xf32>, i32 -> vector<8x256xf32>
    %c1 = arith.constant 1 : index
    %c0_4 = arith.constant 0 : index
    %7 = vector.load %arg3[%c1, %c0_4] : memref<9x256xf32, #tpu.memory_space<vmem>>, vector<1x256xf32>
    %8 = vector.broadcast %7 : vector<1x256xf32> to vector<8x256xf32>
    %9 = arith.mulf %6, %8 : vector<8x256xf32>
    %c15_i32 = arith.constant 15 : i32
    %10 = tpu.dynamic_rotate %1 by %c15_i32 dim 1 : vector<8x256xf32>, i32 -> vector<8x256xf32>
    %c2 = arith.constant 2 : index
    %c0_5 = arith.constant 0 : index
    %11 = vector.load %arg3[%c2, %c0_5] : memref<9x256xf32, #tpu.memory_space<vmem>>, vector<1x256xf32>
    %12 = vector.broadcast %11 : vector<1x256xf32> to vector<8x256xf32>
    %13 = arith.mulf %10, %12 : vector<8x256xf32>
    %c1_i32 = arith.constant 1 : i32
    %14 = tpu.dynamic_rotate %1 by %c1_i32 dim 1 : vector<8x256xf32>, i32 -> vector<8x256xf32>
    %c3 = arith.constant 3 : index
    %c0_6 = arith.constant 0 : index
    %15 = vector.load %arg3[%c3, %c0_6] : memref<9x256xf32, #tpu.memory_space<vmem>>, vector<1x256xf32>
    %16 = vector.broadcast %15 : vector<1x256xf32> to vector<8x256xf32>
    %17 = arith.mulf %14, %16 : vector<8x256xf32>
    %c4 = arith.constant 4 : index
    %c0_7 = arith.constant 0 : index
    %18 = vector.load %arg3[%c4, %c0_7] : memref<9x256xf32, #tpu.memory_space<vmem>>, vector<1x256xf32>
    %19 = vector.broadcast %18 : vector<1x256xf32> to vector<8x256xf32>
    %20 = arith.mulf %1, %19 : vector<8x256xf32>
    %c255_i32 = arith.constant 255 : i32
    %21 = tpu.dynamic_rotate %1 by %c255_i32 dim 1 : vector<8x256xf32>, i32 -> vector<8x256xf32>
    %c5 = arith.constant 5 : index
    %c0_8 = arith.constant 0 : index
    %22 = vector.load %arg3[%c5, %c0_8] : memref<9x256xf32, #tpu.memory_space<vmem>>, vector<1x256xf32>
    %23 = vector.broadcast %22 : vector<1x256xf32> to vector<8x256xf32>
    %24 = arith.mulf %21, %23 : vector<8x256xf32>
    %c241_i32 = arith.constant 241 : i32
    %25 = tpu.dynamic_rotate %1 by %c241_i32 dim 1 : vector<8x256xf32>, i32 -> vector<8x256xf32>
    %c6 = arith.constant 6 : index
    %c0_9 = arith.constant 0 : index
    %26 = vector.load %arg3[%c6, %c0_9] : memref<9x256xf32, #tpu.memory_space<vmem>>, vector<1x256xf32>
    %27 = vector.broadcast %26 : vector<1x256xf32> to vector<8x256xf32>
    %28 = arith.mulf %25, %27 : vector<8x256xf32>
    %c240_i32 = arith.constant 240 : i32
    %29 = tpu.dynamic_rotate %1 by %c240_i32 dim 1 : vector<8x256xf32>, i32 -> vector<8x256xf32>
    %c7 = arith.constant 7 : index
    %c0_10 = arith.constant 0 : index
    %30 = vector.load %arg3[%c7, %c0_10] : memref<9x256xf32, #tpu.memory_space<vmem>>, vector<1x256xf32>
    %31 = vector.broadcast %30 : vector<1x256xf32> to vector<8x256xf32>
    %32 = arith.mulf %29, %31 : vector<8x256xf32>
    %c239_i32 = arith.constant 239 : i32
    %33 = tpu.dynamic_rotate %1 by %c239_i32 dim 1 : vector<8x256xf32>, i32 -> vector<8x256xf32>
    %c8 = arith.constant 8 : index
    %c0_11 = arith.constant 0 : index
    %34 = vector.load %arg3[%c8, %c0_11] : memref<9x256xf32, #tpu.memory_space<vmem>>, vector<1x256xf32>
    %35 = vector.broadcast %34 : vector<1x256xf32> to vector<8x256xf32>
    %36 = arith.mulf %33, %35 : vector<8x256xf32>
    %37 = tpu.concatenate %5, %9, %13, %17, %20, %24, %28, %32, %36 in 0 : vector<8x256xf32>, vector<8x256xf32>, vector<8x256xf32>, vector<8x256xf32>, vector<8x256xf32>, vector<8x256xf32>, vector<8x256xf32>, vector<8x256xf32>, vector<8x256xf32> -> vector<72x256xf32>
    %38 = arith.truncf %37 : vector<72x256xf32> to vector<72x256xbf16>
    %c0_12 = arith.constant 0 : index
    %c0_13 = arith.constant 0 : index
    %39 = vector.load %arg2[%c0_12, %c0_13] : memref<4x72xbf16, #tpu.memory_space<vmem>>, vector<4x72xbf16>
    %cst = arith.constant dense<0.000000e+00> : vector<4x256xf32>
    %40 = tpu.matmul %39, %38, %cst {dimension_numbers = #tpu.dot_dimension_numbers<[1], [0], [0], [1], [0, 0, 1, 1], [], []>} : vector<4x72xbf16>, vector<72x256xbf16>, vector<4x256xf32> -> vector<4x256xf32>
    %c0_14 = arith.constant 0 : index
    %c0_15 = arith.constant 0 : index
    %c0_16 = arith.constant 0 : index
    %41 = vector.load %arg4[%c0_14, %c0_15, %c0_16] : memref<1x4x256xf32, #tpu.memory_space<vmem>>, vector<1x4x256xf32>
    %42 = vector.shape_cast %41 : vector<1x4x256xf32> to vector<4x256xf32>
    %43 = vector.shape_cast %40 : vector<4x256xf32> to vector<1x4x256xf32>
    tpu.vector_store %arg4[%c0_14, %c0_15, %c0_16], %43 {strides = array<i32>} : memref<1x4x256xf32, #tpu.memory_space<vmem>>, vector<1x4x256xf32>,
    return
  }
  func.func @transform_0(%arg0: i32) -> (i32, i32, i32) {
    %c0_i32 = arith.constant 0 : i32
    %c0_i32_0 = arith.constant 0 : i32
    %c0_i32_1 = arith.constant 0 : i32
    return %arg0, %c0_i32, %c0_i32_0 : i32, i32, i32
  }
  func.func @transform_1(%arg0: i32) -> (i32, i32) {
    %c0_i32 = arith.constant 0 : i32
    %c0_i32_0 = arith.constant 0 : i32
    %c0_i32_1 = arith.constant 0 : i32
    return %c0_i32, %c0_i32_0 : i32, i32
  }
  func.func @transform_2(%arg0: i32) -> (i32, i32) {
    %c0_i32 = arith.constant 0 : i32
    %c0_i32_0 = arith.constant 0 : i32
    %c0_i32_1 = arith.constant 0 : i32
    return %c0_i32, %c0_i32_0 : i32, i32
  }
  func.func @transform_3(%arg0: i32) -> (i32, i32, i32) {
    %c0_i32 = arith.constant 0 : i32
    %c0_i32_0 = arith.constant 0 : i32
    %c0_i32_1 = arith.constant 0 : i32
    return %arg0, %c0_i32, %c0_i32_0 : i32, i32, i32
  }
}

</mosaic_0001>

<llo_original>
// kernel: tpu_custom_call.1
$region0: #{tpu_custom_call.1}
  #allocation0 [shape = 'u32[]', space=smem, size = 0x4, offset = 0x4, fixed_abs, tag = 'smem constant byte address 0x4 - core index']
  #allocation1 [shape = 'u32[144,128]{1,0:T(1,128)}', space=vmem, size = 0x12000, scoped, tag = 'internal scratch']
  %s0 = inlined_call_operand.hbm [shape: f32[2,8,256], index: 0, kind: input, shape index: {}]
  %s1 = inlined_call_operand.vmem [shape: bf16[4,72], index: 1, kind: input, shape index: {}]
  %s2 = inlined_call_operand.hbm [shape: f32[9,256], index: 2, kind: input, shape index: {}]
  %s3 = inlined_call_operand.hbm [shape: f32[2,4,256], index: 3, kind: output, shape index: {}]
  %s4 = sld [smem:[#allocation0]]
  $region53: #{tpu_custom_call.1} parent=0
    _
  %s6 = ssub.s32 1, %s4
  %s7 = scalar_select 0, %s6, %s4
  $region1: #{tpu_custom_call.1} parent=0
    #allocation2 [shape = 'u8[16384]{0}', space=vmem, size = 0x4000, scoped, tag = 'input window, operand 0']
    #allocation3 [shape = 's32[2]{0}', space=sflag, size = 0x8, scoped, tag = 'scoped memory for tpu_custom_call.1']
    #allocation4 [shape = 's32[2]{0}', space=sflag, size = 0x8, scoped, tag = 'scoped memory for tpu_custom_call.1']
    #allocation5 [shape = 'u8[16384]{0}', space=vmem, size = 0x4000, scoped, tag = 'input window, operand 2, single buffered']
    #allocation6 [shape = 's32[1]{0}', space=sflag, size = 0x4, scoped, tag = 'scoped memory for tpu_custom_call.1']
    #allocation7 [shape = 'u8[8192]{0}', space=vmem, size = 0x2000, scoped, tag = 'output window, operand 0']
    %8 = vsyncpa [#allocation3], 0
    %s9 = scalar_lea.sflag [#allocation3], 1
    %10 = vsyncpa %s9, 0
    %11 = vsyncpa [#allocation6], 0
    %12 = vsyncpa [#allocation4], 0
    %s13 = scalar_lea.sflag [#allocation4], 1
    %14 = vsyncpa %s13, 0
    loop: start=0, step=1, limit=4
    $region2: #{tpu_custom_call.1} parent=1 // loop_pre_header
      _
    $region3: #{tpu_custom_call.1} parent=1 // loop_header
      %s16 = sphi 0, %s20
      %p17 = scmp.ge.s32.totalorder %s16, 4
      %s26 = sphi 0, %s28
      %s29 = sphi 0, %s26
      %s30 = sphi 0, %s29
      %s46 = sphi 0, %s30
      %s50 = sphi 0, %s50
      %s52 = sphi 0, %s50
      %s53 = sphi 0, %s52
      %s67 = sphi 0, %s53
      %s71 = sphi 0, %s71
      %s73 = sphi 0, %s71
      %s74 = sphi 0, %s73
      %s88 = sphi 0, %s74
      %s94 = sphi 0, %s96
      %s97 = sphi 0, %s94
      %s98 = sphi 0, %s97
      %s114 = sphi 0, %s98
    $region4: #{tpu_custom_call.1} parent=1 // loop_header_branch
      %19 = sbr.rel (%p17) target = $region8
    $region5: #{tpu_custom_call.1} parent=1 // loop_body
      %s21 = ssub.s32 %s16, 1
      %s22 = ssub.s32 %s16, 2
      %s23 = sadd.s32 %s16, 1
      %s24 = ssub.s32 %s16, %s23
      %p25 = scmp.eq.s32.totalorder %s24, 0
      %s27 = sadd.s32 %s26, 1
      %s28 = scalar_select %p25, %s26, %s27
      %p31 = pneg %p25
      %p32 = scmp.eq.s32.totalorder %s16, 1
      %p33 = por %p31, %p32
      %p34 = scmp.ne.s32.totalorder %s26, %s29
      %p35 = scmp.eq.s32.totalorder %s16, 0
      %p36 = por %p34, %p35
      %p37 = scmp.ne.s32.totalorder %s26, %s29
      %p38 = scmp.eq.s32.totalorder %s21, 1
      %p39 = por %p37, %p38
      %p40 = scmp.ne.s32.totalorder %s29, %s30
      %p41 = scmp.eq.s32.totalorder %s21, 0
      %p42 = por %p40, %p41
      %p43 = scmp.ne.s32.totalorder %s29, %s30
      %p44 = scmp.eq.s32.totalorder %s22, 1
      %p45 = por %p43, %p44
      %p47 = scmp.ne.s32.totalorder %s30, %s46
      %p48 = scmp.eq.s32.totalorder %s22, 0
      %p49 = por %p47, %p48
      %s51 = sadd.s32 %s50, 1
      %p54 = scmp.eq.s32.totalorder %s16, 1
      %p55 = scmp.ne.s32.totalorder %s50, %s52
      %p56 = scmp.eq.s32.totalorder %s16, 0
      %p57 = por %p55, %p56
      %p58 = scmp.ne.s32.totalorder %s50, %s52
      %p59 = scmp.eq.s32.totalorder %s21, 1
      %p60 = por %p58, %p59
      %p61 = scmp.ne.s32.totalorder %s52, %s53
      %p62 = scmp.eq.s32.totalorder %s21, 0
      %p63 = por %p61, %p62
      %p64 = scmp.ne.s32.totalorder %s52, %s53
      %p65 = scmp.eq.s32.totalorder %s22, 1
      %p66 = por %p64, %p65
      %p68 = scmp.ne.s32.totalorder %s53, %s67
      %p69 = scmp.eq.s32.totalorder %s22, 0
      %p70 = por %p68, %p69
      %s72 = sadd.s32 %s71, 1
      %p75 = scmp.eq.s32.totalorder %s16, 1
      %p76 = scmp.ne.s32.totalorder %s71, %s73
      %p77 = scmp.eq.s32.totalorder %s16, 0
      %p78 = por %p76, %p77
      %p79 = scmp.ne.s32.totalorder %s71, %s73
      %p80 = scmp.eq.s32.totalorder %s21, 1
      %p81 = por %p79, %p80
      %p82 = scmp.ne.s32.totalorder %s73, %s74
      %p83 = scmp.eq.s32.totalorder %s21, 0
      %p84 = por %p82, %p83
      %p85 = scmp.ne.s32.totalorder %s73, %s74
      %p86 = scmp.eq.s32.totalorder %s22, 1
      %p87 = por %p85, %p86
      %p89 = scmp.ne.s32.totalorder %s74, %s88
      %p90 = scmp.eq.s32.totalorder %s22, 0
      %p91 = por %p89, %p90
      %s92 = ssub.s32 %s16, %s23
      %p93 = scmp.eq.s32.totalorder %s92, 0
      %s95 = sadd.s32 %s94, 1
      %s96 = scalar_select %p93, %s94, %s95
      %p99 = pneg %p93
      %p100 = scmp.eq.s32.totalorder %s16, 1
      %p101 = por %p99, %p100
      %p102 = scmp.ne.s32.totalorder %s94, %s97
      %p103 = scmp.eq.s32.totalorder %s16, 0
      %p104 = por %p102, %p103
      %p105 = scmp.ne.s32.totalorder %s94, %s97
      %p106 = scmp.eq.s32.totalorder %s21, 1
      %p107 = por %p105, %p106
      %p108 = scmp.ne.s32.totalorder %s97, %s98
      %p109 = scmp.eq.s32.totalorder %s21, 0
      %p110 = por %p108, %p109
      %p111 = scmp.ne.s32.totalorder %s97, %s98
      %p112 = scmp.eq.s32.totalorder %s22, 1
      %p113 = por %p111, %p112
      %p115 = scmp.ne.s32.totalorder %s98, %s114
      %p116 = scmp.eq.s32.totalorder %s22, 0
      %p117 = por %p115, %p116
      %p118 = scmp.le.s32.totalorder 1, %s16
      %p119 = scmp.lt.s32.totalorder %s16, 3
      %p120 = pnand %p118, %p119
      %p121 = pneg %p120
      // Predicated region
      $region9: #{tpu_custom_call.1} parent=5 // pred_check
        _
      $region10: #{tpu_custom_call.1} parent=5 // pred_check_branch
        %123 = sbr.rel (%p120) target = $region12
      $region11: #{tpu_custom_call.1} parent=5 // pred_region
        %s124 = ssub.s32 %s16, 1
        // Predicated region
        $region13: #{tpu_custom_call.1} parent=11 // pred_check
          %p125 = pneg %p63
        $region14: #{tpu_custom_call.1} parent=11 // pred_check_branch
          %127 = sbr.rel (%p125) target = $region16
        $region15: #{tpu_custom_call.1} parent=11 // pred_region
          _
        $region16: #{tpu_custom_call.1} parent=11 // pred_fallthru
          _
        // Predicated region
        $region17: #{tpu_custom_call.1} parent=11 // pred_check
          %p128 = pneg %p84
        $region18: #{tpu_custom_call.1} parent=11 // pred_check_branch
          %130 = sbr.rel (%p128) target = $region20
        $region19: #{tpu_custom_call.1} parent=11 // pred_region
          %s132 = ssub.s32 512, 512
          %133 = vsyncadd [#allocation6], %s132
          %s134 = sshll.u32 [#allocation5], 4
          %s135 = int_to_ptr.vmem [resolvable:$true] %s134
          %140 = dma.hbm_to_vmem [thread:$0]  %s2, 512, %s135, [#allocation6], 256, 256, 16
        $region20: #{tpu_custom_call.1} parent=11 // pred_fallthru
          _
      $region12: #{tpu_custom_call.1} parent=5 // pred_fallthru
        _
      %p141 = scmp.lt.s32.totalorder %s16, 2
      // Predicated region
      $region21: #{tpu_custom_call.1} parent=5 // pred_check
        %p142 = pneg %p141
      $region22: #{tpu_custom_call.1} parent=5 // pred_check_branch
        %144 = sbr.rel (%p142) target = $region24
      $region23: #{tpu_custom_call.1} parent=5 // pred_region
        // Predicated region
        $region25: #{tpu_custom_call.1} parent=23 // pred_check
          %p145 = pneg %p36
        $region26: #{tpu_custom_call.1} parent=23 // pred_check_branch
          %147 = sbr.rel (%p145) target = $region28
        $region27: #{tpu_custom_call.1} parent=23 // pred_region
          %s148 = sand.u32 %s26, 1
          %s149 = scalar_lea.sflag [#allocation3], %s148
          %s150 = sand.u32 %s26, 1
          %s151 = smul.addr %s150, 16
          %s152 = scalar_lea.vmem [#allocation2], %s151
          %s154 = ssub.s32 256, 256
          %155 = vsyncadd %s149, %s154
          %s156 = smul.addr %s16, 2
          %s157 = smul.addr %s156, 128
          %s158 = scalar_lea.hbm %s0, %s157
          %s160 = sshll.u32 %s152, 4
          %s161 = int_to_ptr.vmem [resolvable:$true] %s160
          %163 = dma.hbm_to_vmem [thread:$0]  %s158, 256, %s161, %s149
        $region28: #{tpu_custom_call.1} parent=23 // pred_fallthru
          _
      $region24: #{tpu_custom_call.1} parent=5 // pred_fallthru
        _
      %p164 = scmp.le.s32.totalorder 1, %s16
      %p165 = scmp.lt.s32.totalorder %s16, 3
      %p166 = pnand %p164, %p165
      %p167 = pneg %p166
      // Predicated region
      $region29: #{tpu_custom_call.1} parent=5 // pred_check
        _
      $region30: #{tpu_custom_call.1} parent=5 // pred_check_branch
        %169 = sbr.rel (%p166) target = $region32
      $region31: #{tpu_custom_call.1} parent=5 // pred_region
        %s170 = ssub.s32 %s16, 1
        %s171 = sand.u32 %s29, 1
        %s172 = scalar_lea.sflag [#allocation3], %s171
        %s173 = sand.u32 %s29, 1
        %s174 = smul.addr %s173, 16
        %s175 = scalar_lea.vmem [#allocation2], %s174
        // Predicated region
        $region33: #{tpu_custom_call.1} parent=31 // pred_check
          %p176 = pneg %p42
        $region34: #{tpu_custom_call.1} parent=31 // pred_check_branch
          %178 = sbr.rel (%p176) target = $region36
        $region35: #{tpu_custom_call.1} parent=31 // pred_region
          %179 = dma.done %s172, 256
        $region36: #{tpu_custom_call.1} parent=31 // pred_fallthru
          _
        // Predicated region
        $region37: #{tpu_custom_call.1} parent=31 // pred_check
          %p180 = pneg %p84
        $region38: #{tpu_custom_call.1} parent=31 // pred_check_branch
          %182 = sbr.rel (%p180) target = $region40
        $region39: #{tpu_custom_call.1} parent=31 // pred_region
          %183 = dma.done [#allocation6], 512
        $region40: #{tpu_custom_call.1} parent=31 // pred_fallthru
          _
        %s184 = sand.u32 %s29, 1
        %s185 = scalar_lea.sflag [#allocation3], %s184
        %s186 = sand.u32 %s29, 1
        %s187 = smul.addr %s186, 16
        %s188 = scalar_lea.vmem [#allocation2], %s187
        %p189 = pneg %p42
        %p190 = pneg %p39
        %p191 = pneg %p63
        %p192 = pneg %p60
        %p193 = pneg %p84
        %p194 = pneg %p81
        %p195 = pneg %p110
        %p196 = pneg %p107
        %s197 = sand.u32 %s97, 1
        %s198 = scalar_lea.sflag [#allocation4], %s197
        %s199 = sand.u32 %s97, 1
        %s200 = smul.addr %s199, 8
        %s201 = scalar_lea.vmem [#allocation7], %s200
        %v203 = vld [vmem:[%s175] sm:$0xff]
        %v204 = vld [vmem:[%s175 + $0x8] sm:$0xff]
        %205 = vrot.lane.b32.xlu0 %v203, 17
        %v206 = vpop.permute.xlu0 %205
        %207 = vrot.lane.b32.xlu0 %v204, 17
        %v208 = vpop.permute.xlu0 %207
        %v209 = vlaneseq
        %v210 = vand.u32 %v209, 127
        %vm211 = vcmp.lt.s32.totalorder %v210, 17
        %v212 = vsel %vm211, %v206, %v208
        %v213 = vsel %vm211, %v208, %v206
        %v214 = vld [vmem:[#allocation5] ss:$8 sm:$0x3]
        %v216 = vlaneseq
        %v217 = vshrl.u32 %v216, 7
        %v218 = vsub.s32 0, %v217
        %v219 = vrot.slane %v214, %v218
        %v220 = vlaneseq
        %v221 = vshrl.u32 %v220, 7
        %v222 = vsub.s32 1, %v221
        %v223 = vrot.slane %v214, %v222
        %v226 = vmul.f32 %v213, %v219
        %v227 = vmul.f32 %v212, %v223
        %228 = vrot.lane.b32.xlu0 %v203, 16
        %v229 = vpop.permute.xlu0 %228
        %230 = vrot.lane.b32.xlu0 %v204, 16
        %v231 = vpop.permute.xlu0 %230
        %vm232 = vcmp.lt.s32.totalorder %v210, 16
        %v233 = vsel %vm232, %v229, %v231
        %v234 = vsel %vm232, %v231, %v229
        %s235 = scalar_lea.vmem [#allocation5], 1
        %v236 = vld [vmem:[%s235] ss:$8 sm:$0x3]
        %v238 = vlaneseq
        %v239 = vshrl.u32 %v238, 7
        %v240 = vsub.s32 0, %v239
        %v241 = vrot.slane %v236, %v240
        %v242 = vlaneseq
        %v243 = vshrl.u32 %v242, 7
        %v244 = vsub.s32 1, %v243
        %v245 = vrot.slane %v236, %v244
        %v248 = vmul.f32 %v234, %v241
        %v249 = vmul.f32 %v233, %v245
        %250 = vrot.lane.b32.xlu0 %v203, 15
        %v251 = vpop.permute.xlu0 %250
        %252 = vrot.lane.b32.xlu0 %v204, 15
        %v253 = vpop.permute.xlu0 %252
        %vm254 = vcmp.lt.s32.totalorder %v210, 15
        %v255 = vsel %vm254, %v251, %v253
        %v256 = vsel %vm254, %v253, %v251
        %s257 = scalar_lea.vmem [#allocation5], 2
        %v258 = vld [vmem:[%s257] ss:$8 sm:$0x3]
        %v260 = vlaneseq
        %v261 = vshrl.u32 %v260, 7
        %v262 = vsub.s32 0, %v261
        %v263 = vrot.slane %v258, %v262
        %v264 = vlaneseq
        %v265 = vshrl.u32 %v264, 7
        %v266 = vsub.s32 1, %v265
        %v267 = vrot.slane %v258, %v266
        %v270 = vmul.f32 %v256, %v263
        %v271 = vmul.f32 %v255, %v267
        %272 = vrot.lane.b32.xlu0 %v203, 1
        %v273 = vpop.permute.xlu0 %272
        %274 = vrot.lane.b32.xlu0 %v204, 1
        %v275 = vpop.permute.xlu0 %274
        %vm276 = vcmp.lt.s32.totalorder %v210, 1
        %v277 = vsel %vm276, %v273, %v275
        %v278 = vsel %vm276, %v275, %v273
        %s279 = scalar_lea.vmem [#allocation5], 3
        %v280 = vld [vmem:[%s279] ss:$8 sm:$0x3]
        %v282 = vlaneseq
        %v283 = vshrl.u32 %v282, 7
        %v284 = vsub.s32 0, %v283
        %v285 = vrot.slane %v280, %v284
        %v286 = vlaneseq
        %v287 = vshrl.u32 %v286, 7
        %v288 = vsub.s32 1, %v287
        %v289 = vrot.slane %v280, %v288
        %v292 = vmul.f32 %v278, %v285
        %v293 = vmul.f32 %v277, %v289
        %s294 = scalar_lea.vmem [#allocation5], 4
        %v295 = vld [vmem:[%s294] ss:$8 sm:$0x3]
        %v297 = vlaneseq
        %v298 = vshrl.u32 %v297, 7
        %v299 = vsub.s32 0, %v298
        %v300 = vrot.slane %v295, %v299
        %v301 = vlaneseq
        %v302 = vshrl.u32 %v301, 7
        %v303 = vsub.s32 1, %v302
        %v304 = vrot.slane %v295, %v303
        %v307 = vmul.f32 %v203, %v300
        %v308 = vmul.f32 %v204, %v304
        %309 = vrot.lane.b32.xlu0 %v203, 127
        %v310 = vpop.permute.xlu0 %309
        %311 = vrot.lane.b32.xlu0 %v204, 127
        %v312 = vpop.permute.xlu0 %311
        %vm313 = vcmp.lt.s32.totalorder %v210, 127
        %v314 = vsel %vm313, %v310, %v312
        %v315 = vsel %vm313, %v312, %v310
        %s316 = scalar_lea.vmem [#allocation5], 5
        %v317 = vld [vmem:[%s316] ss:$8 sm:$0x3]
        %v319 = vlaneseq
        %v320 = vshrl.u32 %v319, 7
        %v321 = vsub.s32 0, %v320
        %v322 = vrot.slane %v317, %v321
        %v323 = vlaneseq
        %v324 = vshrl.u32 %v323, 7
        %v325 = vsub.s32 1, %v324
        %v326 = vrot.slane %v317, %v325
        %v329 = vmul.f32 %v314, %v322
        %v330 = vmul.f32 %v315, %v326
        %331 = vrot.lane.b32.xlu0 %v203, 113
        %v332 = vpop.permute.xlu0 %331
        %333 = vrot.lane.b32.xlu0 %v204, 113
        %v334 = vpop.permute.xlu0 %333
        %vm335 = vcmp.lt.s32.totalorder %v210, 113
        %v336 = vsel %vm335, %v332, %v334
        %v337 = vsel %vm335, %v334, %v332
        %s338 = scalar_lea.vmem [#allocation5], 6
        %v339 = vld [vmem:[%s338] ss:$8 sm:$0x3]
        %v341 = vlaneseq
        %v342 = vshrl.u32 %v341, 7
        %v343 = vsub.s32 0, %v342
        %v344 = vrot.slane %v339, %v343
        %v345 = vlaneseq
        %v346 = vshrl.u32 %v345, 7
        %v347 = vsub.s32 1, %v346
        %v348 = vrot.slane %v339, %v347
        %v351 = vmul.f32 %v336, %v344
        %v352 = vmul.f32 %v337, %v348
        %353 = vrot.lane.b32.xlu0 %v203, 112
        %v354 = vpop.permute.xlu0 %353
        %355 = vrot.lane.b32.xlu0 %v204, 112
        %v356 = vpop.permute.xlu0 %355
        %vm357 = vcmp.lt.s32.totalorder %v210, 112
        %v358 = vsel %vm357, %v354, %v356
        %v359 = vsel %vm357, %v356, %v354
        %s360 = scalar_lea.vmem [#allocation5], 7
        %v361 = vld [vmem:[%s360] ss:$8 sm:$0x3]
        %v363 = vlaneseq
        %v364 = vshrl.u32 %v363, 7
        %v365 = vsub.s32 0, %v364
        %v366 = vrot.slane %v361, %v365
        %v367 = vlaneseq
        %v368 = vshrl.u32 %v367, 7
        %v369 = vsub.s32 1, %v368
        %v370 = vrot.slane %v361, %v369
        %v373 = vmul.f32 %v358, %v366
        %v374 = vmul.f32 %v359, %v370
        %375 = vrot.lane.b32.xlu0 %v203, 111
        %v376 = vpop.permute.xlu0 %375
        %377 = vrot.lane.b32.xlu0 %v204, 111
        %v378 = vpop.permute.xlu0 %377
        %vm379 = vcmp.lt.s32.totalorder %v210, 111
        %v380 = vsel %vm379, %v376, %v378
        %v381 = vsel %vm379, %v378, %v376
        %s382 = scalar_lea.vmem [#allocation5], 16
        %v383 = vld [vmem:[%s382] ss:$8 sm:$0x3]
        %v385 = vlaneseq
        %v386 = vshrl.u32 %v385, 7
        %v387 = vsub.s32 0, %v386
        %v388 = vrot.slane %v383, %v387
        %v389 = vlaneseq
        %v390 = vshrl.u32 %v389, 7
        %v391 = vsub.s32 1, %v390
        %v392 = vrot.slane %v383, %v391
        %v395 = vmul.f32 %v380, %v388
        %v396 = vmul.f32 %v381, %v392
        %v397 = vpack.c.bf16 %v248, %v226
        %v398 = vpack.c.bf16 %v249, %v227
        %v399 = vpack.c.bf16 %v292, %v270
        %v400 = vpack.c.bf16 %v293, %v271
        %v401 = vpack.c.bf16 %v329, %v307
        %v402 = vpack.c.bf16 %v330, %v308
        %v403 = vpack.c.bf16 %v373, %v351
        %v404 = vpack.c.bf16 %v374, %v352
        %v405 = vpack.c.bf16 %v395, %v395
        %v406 = vpack.c.bf16 %v396, %v396
        %v407 = vld [vmem:[%s1] sm:$0x3]
        %vm408 = vcmask 588800
        %v410 = vsel %vm408, %v407, 0
        %vm412 = vcmask 1043456
        %v414 = vsel %vm412, %v405, 0
        %v417 = vsel %vm412, %v406, 0
        %419 = vmatprep.subr.bf16.mxu0 %v398
        %420 = vmatpush1.bf16.msra.mxu0 %v397
        %421 = vmatprep.subr.bf16.mxu0 %v400
        %422 = vmatpush1.bf16.msra.mxu0 %v399
        %423 = vmatprep.subr.bf16.mxu0 %v402
        %424 = vmatpush1.bf16.msra.mxu0 %v401
        %425 = vmatprep.subr.bf16.mxu0 %v404
        %426 = vmatpush1.bf16.msra.mxu0 %v403
        %427 = vmatprep.subr.bf16.mxu0 %v417
        %428 = vmatpush1.bf16.msra.mxu0 %v414
        %429 = vmatprep.subr.bf16.mxu0 0
        %430 = vmatpush1.bf16.msra.mxu0 0
        %431 = vmatprep.subr.bf16.mxu0 0
        %432 = vmatpush1.bf16.msra.mxu0 0
        %433 = vmatprep.subr.bf16.mxu0 0
        %434 = vmatpush1.bf16.msra.mxu0 0
        %435 = vmatprep.subr.bf16.mxu0 0
        %436 = vmatpush1.bf16.msra.mxu0 0
        %437 = vmatprep.subr.bf16.mxu0 0
        %438 = vmatpush1.bf16.msra.mxu0 0
        %439 = vmatprep.subr.bf16.mxu0 0
        %440 = vmatpush1.bf16.msra.mxu0 0
        %441 = vmatprep.subr.bf16.mxu0 0
        %442 = vmatpush1.bf16.msra.mxu0 0
        %443 = vmatprep.subr.bf16.mxu0 0
        %444 = vmatpush1.bf16.msra.mxu0 0
        %445 = vmatprep.subr.bf16.mxu0 0
        %446 = vmatpush1.bf16.msra.mxu0 0
        %447 = vmatprep.subr.bf16.mxu0 0
        %448 = vmatpush1.bf16.msra.mxu0 0
        %449 = vmatprep.subr.bf16.mxu0 0
        %450 = vmatpush1.bf16.msra.mxu0 0
        %451 = vmatprep.mubr.bf16.mxu0 0
        %452 = vmatmul.mubr.bf16.gmra.mrb[0].mxu0 %v410
        %v453 = vpop.f32.mrb[0].mxu0
        %v454 = vadd.f32 0.0, %v453
        %v455 = vpop.f32.mrb[0].mxu0
        %v456 = vadd.f32 0.0, %v455
        %v457 = vpop.f32.mrb[0].mxu0
        %v458 = vpop.f32.mrb[0].mxu0
        %459 = vdwg.mxu0
        %v462 = vcombine.low %v454, %v456
        %464 = vst [vmem:[%s201] sm:$0xff] %v462
        %s465 = sand.u32 %s97, 1
        %s466 = scalar_lea.sflag [#allocation4], %s465
        %s467 = sand.u32 %s97, 1
        %s468 = smul.addr %s467, 8
        %s469 = scalar_lea.vmem [#allocation7], %s468
        // Predicated region
        $region41: #{tpu_custom_call.1} parent=31 // pred_check
          %p470 = pneg %p107
        $region42: #{tpu_custom_call.1} parent=31 // pred_check_branch
          %472 = sbr.rel (%p470) target = $region44
        $region43: #{tpu_custom_call.1} parent=31 // pred_region
          %s474 = ssub.s32 128, 128
          %475 = vsyncadd %s466, %s474
          %s476 = smul.addr %s21, 2
          %s477 = smul.addr %s476, 64
          %s478 = scalar_lea.hbm %s3, %s477
          %s480 = sshll.u32 %s469, 4
          %s481 = int_to_ptr.vmem [resolvable:$true] %s480
          %483 = dma.vmem_to_hbm [thread:$0]  %s481, 128, %s478, %s466
        $region44: #{tpu_custom_call.1} parent=31 // pred_fallthru
          _
      $region32: #{tpu_custom_call.1} parent=5 // pred_fallthru
        _
      %p484 = scmp.le.s32.totalorder 2, %s16
      // Predicated region
      $region45: #{tpu_custom_call.1} parent=5 // pred_check
        %p485 = pneg %p484
      $region46: #{tpu_custom_call.1} parent=5 // pred_check_branch
        %487 = sbr.rel (%p485) target = $region48
      $region47: #{tpu_custom_call.1} parent=5 // pred_region
        %s488 = ssub.s32 %s16, 2
        // Predicated region
        $region49: #{tpu_custom_call.1} parent=47 // pred_check
          %p489 = pneg %p113
        $region50: #{tpu_custom_call.1} parent=47 // pred_check_branch
          %491 = sbr.rel (%p489) target = $region52
        $region51: #{tpu_custom_call.1} parent=47 // pred_region
          %s492 = sand.u32 %s98, 1
          %s493 = scalar_lea.sflag [#allocation4], %s492
          %s494 = sand.u32 %s98, 1
          %s495 = smul.addr %s494, 8
          %s496 = scalar_lea.vmem [#allocation7], %s495
          %497 = dma.done %s493, 128
        $region52: #{tpu_custom_call.1} parent=47 // pred_fallthru
          _
      $region48: #{tpu_custom_call.1} parent=5 // pred_fallthru
        _
    $region6: #{tpu_custom_call.1} parent=1 // loop_footer
      %s20 = sadd.s32 1, %s16
    $region7: #{tpu_custom_call.1} parent=1 // loop_footer_branch
      %15 = sbr.rel target = $region3
    $region8: #{tpu_custom_call.1} parent=1 // loop_exit
      _
    %498 = vsyncpa [#allocation3], 1
    %s499 = scalar_lea.sflag [#allocation3], 1
    %500 = vsyncpa %s499, 1
    %501 = vsyncpa [#allocation6], 1
    %502 = vsyncpa [#allocation4], 1
    %s503 = scalar_lea.sflag [#allocation4], 1
    %504 = vsyncpa %s503, 1

</llo_original>
